<compile_context>
chip_gen: v7x
topology: tpu7x:2x2x1
jax: 0.10.0
libtpu: 0.0.40
codegen_flags: <defaults>
</compile_context>

<pallas_src>
import functools

import jax
import jax.numpy as jnp
from jax.experimental import pallas as pl
from jax.experimental.pallas import tpu as pltpu


# ----------------------------------------------------------------------------
# Kernel
# ----------------------------------------------------------------------------
def residual_block_kernel(x_ref, w1_ref, sh1_ref, w2_ref, sh2_ref, out_ref,
                          *, num, k1, k2, H):
    """All `num` residual iterations for a block of TB images, fully fused.

    x_ref:   (TB*H, W*C) f32                  stacked input rows (TB images)
    w1_ref:  (num, k1*W*C,     W*C_mid) bf16  banded conv-1 weights (BN scale folded)
    sh1_ref: (num, 1,          W*C_mid) f32   folded BN-1 shift
    w2_ref:  (num, k2*W*C_mid, W*C)     bf16  banded conv-2 weights (BN scale folded)
    sh2_ref: (num, 1,          W*C)     f32   folded BN-2 shift
    out_ref: (TB*H, W*C) f32
    """
    M, WC = x_ref.shape
    x = x_ref[...]                                    # (M, W*C) f32

    # Row shifts needed by the 'same'-padded k_h taps of the two convs.
    shifts = sorted({kh - (k - 1) // 2
                     for k in (k1, k2) if k > 1
                     for kh in range(k)} - {0})

    if shifts:
        # Hoisted once per grid step (JAX does not CSE broadcasts): per-shift
        # edge masks that zero any tap crossing an image boundary (images are
        # stacked every H rows along the M axis).
        h_loc = jax.lax.broadcasted_iota(jnp.int32, (M, 1), 0) % H
        edge_mask = {
            s: ((h_loc + s >= 0) & (h_loc + s < H)).astype(jnp.float32)
            for s in shifts
        }

    def tap(a, s):
        # b[j] = a[j + s] if row j+s lies in the same image as row j, else 0
        # (exactly the zero contribution of an out-of-image conv tap under
        # 'same' padding).  Circular shift of real rows; wrap rows are masked.
        if s == 0:
            return a
        # TODO(synk): pltpu.roll(a, -s % M, axis=0) would do this shift in the
        # XLU slot; slice+concat kept for lowering robustness.
        rolled = jnp.concatenate([a[s:], a[:s]], axis=0)
        return rolled * edge_mask[s]

    def conv_bn_lrelu(a, w_ref, sh_ref, it, k):
        # Stride-1 'same' conv + folded BN + LeakyReLU(0.1) as ONE matmul:
        # the k_h row-shifted operands are concatenated along the contraction
        # axis against the row-stacked banded weight matrix.
        p = (k - 1) // 2
        if k == 1:
            op = a
        else:
            op = jnp.concatenate([tap(a, kh - p) for kh in range(k)], axis=1)
        acc = jnp.dot(op.astype(jnp.bfloat16), w_ref[it],
                      preferred_element_type=jnp.float32)
        t = acc + sh_ref[it]                          # folded BN shift
        return jnp.maximum(t, 0.1 * t)                # LeakyReLU(0.1)

    # `num` is small for Darknet residual stacks -> fully unrolled.
    # TODO(synk): for large `num`, switch to lax.fori_loop with dynamic
    # first-axis indexing of the weight refs to bound code size.
    for it in range(num):
        y = conv_bn_lrelu(x, w1_ref, sh1_ref, it, k1)
        z = conv_bn_lrelu(y, w2_ref, sh2_ref, it, k2)
        x = x + z                                     # residual skip (f32)
    out_ref[...] = x.astype(out_ref.dtype)


# ----------------------------------------------------------------------------
# Wrapper: layout plumbing + weight/BN folding (plain JAX), then one pallas_call.
# ----------------------------------------------------------------------------
def _banded_conv_weight(w, gamma, beta, mean, var, W, eps):
    """Fold a (C_out, C_in, k, k) conv + inference BN into one banded matmul.

    Returns:
      B : (k*W*C_in, W*C_out) bf16 -- row block kh multiplies the input slab
          rows shifted by (kh - pad); k_w taps, the channel contraction and
          the BN scale are all folded into the band (W-padding = zero blocks).
      sh: (1, W*C_out) f32 -- folded BN shift, tiled over W for the lane layout.
    In the (rows, W*C) slab layout:
      out_row[h] = sum_kh inp_row[h + kh - pad] @ B_block[kh]  + sh
    reproduces the stride-1, 'same'-padded conv + BatchNorm (inference).
    """
    C_out, C_in, k, _ = w.shape
    assert k % 2 == 1, "'same' padding (k-1)//2 assumes an odd kernel size"
    pad = (k - 1) // 2
    scale = gamma / jnp.sqrt(var + eps)                 # (C_out,)
    shift = beta - mean * scale                         # (C_out,)
    wi = jnp.arange(W)[:, None]                         # input column  w_in
    wo = jnp.arange(W)[None, :]                         # output column w_out
    kw = wi - wo + pad                                  # (W, W) k_w tap index
    valid = (kw >= 0) & (kw < k)
    kw_c = jnp.clip(kw, 0, k - 1)
    B = w[:, :, :, kw_c]                                # (C_out, C_in, k_h, W_in, W_out)
    B = jnp.where(valid[None, None, None], B, 0.0)
    B = B * scale[:, None, None, None, None]            # fold BN scale into weights
    B = jnp.transpose(B, (2, 3, 1, 4, 0))                # (k_h, w_in, c_in, w_out, c_out)
    B = B.reshape(k * W * C_in, W * C_out)               # K-concat of the k_h taps
    sh = jnp.tile(shift, W)[None, :]                      # (1, W*C_out)
    return B.astype(jnp.bfloat16), sh.astype(jnp.float32)


def _pick_tb(n, h, tb_max=8):
    """Images per grid step: fold batch into the matmul M dimension (MXU fill),
    keep >= 2 grid steps so both v7x TensorCores get work, and keep the block's
    second-minor dim (tb*h) a multiple of 8."""
    cands = [t for t in range(1, n + 1)
             if n % t == 0 and t <= tb_max and (t * h) % 8 == 0]
    multi = [t for t in cands if n // t >= 2]
    if multi:
        return max(multi)
    if cands:
        return max(cands)
    return n   # single block == full array (tiling constraint trivially met)


def residual_block(x_nchw, blocks, eps=1e-5):
    """blocks: list (length num) of
         ((w1, g1, b1, m1, v1), (w2, g2, b2, m2, v2))
       with w1: (C_mid, C, k1, k1), w2: (C, C_mid, k2, k2); conv bias=False,
       stride 1 (required anyway for the residual add to type-check)."""
    N, C, H, W = x_nchw.shape
    num = len(blocks)
    (w1_0, *_), (w2_0, *_) = blocks[0]
    k1, k2 = w1_0.shape[-1], w2_0.shape[-1]
    C_mid = w1_0.shape[0]
    assert w1_0.shape[1] == C and w2_0.shape[0] == C and w2_0.shape[1] == C_mid, \
        "residual add requires conv-2 C_out == input C"
    # TODO(synk): for large C (W*C >> 256 lanes) the W-folded banded layout
    # inflates the 1x1-conv weights/FLOPs ~W x; switch that conv to a plain
    # (C_in, C_out) channel matmul and tile W in that regime.

    WC = W * C
    # Lane-dense flat slab: (N*H, W*C); batch and height live on the matmul M axis.
    x2d = jnp.transpose(x_nchw, (0, 2, 3, 1)).reshape(N * H, WC).astype(jnp.float32)

    w1b, sh1, w2b, sh2 = [], [], [], []
    for (w1, g1, b1, m1, v1), (w2, g2, b2, m2, v2) in blocks:
        B, s = _banded_conv_weight(w1, g1, b1, m1, v1, W, eps)
        w1b.append(B); sh1.append(s)
        B, s = _banded_conv_weight(w2, g2, b2, m2, v2, W, eps)
        w2b.append(B); sh2.append(s)
    w1b = jnp.stack(w1b)     # (num, k1*W*C,     W*C_mid)  bf16
    sh1 = jnp.stack(sh1)     # (num, 1,          W*C_mid)  f32
    w2b = jnp.stack(w2b)     # (num, k2*W*C_mid, W*C)      bf16
    sh2 = jnp.stack(sh2)     # (num, 1,          W*C)      f32

    TB = _pick_tb(N, H)
    MB = TB * H

    def resident(arr):       # full-array block, constant index -> stays in VMEM
        return pl.BlockSpec(arr.shape, lambda n: (0, 0, 0))
    # TODO(synk): at larger C/num, add pipeline_mode=pl.Buffered(1) on the
    # weight specs (or a grid axis over `it`) so they are not double-buffered.

    kernel = functools.partial(residual_block_kernel, num=num, k1=k1, k2=k2, H=H)

    out2d = pl.pallas_call(
        kernel,
        out_shape=jax.ShapeDtypeStruct((N * H, WC), jnp.float32),
        grid=(N // TB,),
        in_specs=[
            pl.BlockSpec((MB, WC), lambda n: (n, 0)),   # TB images per grid step
            resident(w1b), resident(sh1), resident(w2b), resident(sh2),
        ],
        out_specs=pl.BlockSpec((MB, WC), lambda n: (n, 0)),
        compiler_params=pltpu.CompilerParams(
            dimension_semantics=("parallel",)),          # megacore over batch blocks
    )(x2d, w1b, sh1, w2b, sh2)

    return jnp.transpose(out2d.reshape(N, H, W, C), (0, 3, 1, 2))  # back to NCHW


# ----------------------------------------------------------------------------
# Pure-JAX reference (NCHW) for validation.
# ----------------------------------------------------------------------------
def reference(x, blocks, eps=1e-5):
    def bn(y, g, b, m, v):
        s = g / jnp.sqrt(v + eps)
        return y * s[None, :, None, None] + (b - m * s)[None, :, None, None]

    def leaky(y):
        return jnp.where(y > 0, y, 0.1 * y)

    for (w1, g1, b1, m1, v1), (w2, g2, b2, m2, v2) in blocks:
        ori = x
        p1 = (w1.shape[-1] - 1) // 2
        y = jax.lax.conv_general_dilated(
            x, w1, window_strides=(1, 1), padding=((p1, p1), (p1, p1)),
            dimension_numbers=("NCHW", "OIHW", "NCHW"))
        y = leaky(bn(y, g1, b1, m1, v1))
        p2 = (w2.shape[-1] - 1) // 2
        z = jax.lax.conv_general_dilated(
            y, w2, window_strides=(1, 1), padding=((p2, p2), (p2, p2)),
            dimension_numbers=("NCHW", "OIHW", "NCHW"))
        z = leaky(bn(z, g2, b2, m2, v2))
        x = ori + z
    return x


if __name__ == "__main__":
    # Residual_Block(param_1=[8, 4, 1, 1, False], param_2=[4, 8, 3, 1, False], num=2)
    N, C, H, W = 4, 8, 16, 16        # W*C = 128 -> exactly one lane tile
    C_mid = 4
    num = 2
    eps = 1e-5

    key = jax.random.PRNGKey(0)
    kx, key = jax.random.split(key)
    x = jax.random.normal(kx, (N, C, H, W), dtype=jnp.float32)

    blocks = []
    for _ in range(num):
        ks = jax.random.split(key, 11)
        key = ks[0]
        w1 = jax.random.normal(ks[1], (C_mid, C, 1, 1), jnp.float32) * 0.1
        g1 = 1.0 + 0.1 * jax.random.normal(ks[2], (C_mid,), jnp.float32)
        b1 = 0.1 * jax.random.normal(ks[3], (C_mid,), jnp.float32)
        m1 = 0.1 * jax.random.normal(ks[4], (C_mid,), jnp.float32)
        v1 = jnp.abs(jax.random.normal(ks[5], (C_mid,), jnp.float32)) + 0.5
        w2 = jax.random.normal(ks[6], (C, C_mid, 3, 3), jnp.float32) * 0.1
        g2 = 1.0 + 0.1 * jax.random.normal(ks[7], (C,), jnp.float32)
        b2 = 0.1 * jax.random.normal(ks[8], (C,), jnp.float32)
        m2 = 0.1 * jax.random.normal(ks[9], (C,), jnp.float32)
        v2 = jnp.abs(jax.random.normal(ks[10], (C,), jnp.float32)) + 0.5
        blocks.append(((w1, g1, b1, m1, v1), (w2, g2, b2, m2, v2)))

    out = jax.block_until_ready(residual_block(x, blocks, eps=eps))
    ref = jax.block_until_ready(reference(x, blocks, eps=eps))

    assert out.shape == (N, C, H, W), out.shape
    max_err = float(jnp.max(jnp.abs(out - ref)))
    # bf16 matmul operands (f32 accumulate): tolerance relaxed vs the all-f32 version.
    assert jnp.allclose(out, ref, rtol=5e-2, atol=5e-2), max_err
    print("KERNEL_OK")
</pallas_src>

<mosaic_0001>
module attributes {stable_mosaic.version = 11 : i64} {
  func.func @residual_block_kernel(%arg0: i32, %arg1: memref<32x128xf32, #tpu.memory_space<vmem>>, %arg2: memref<2x128x64xbf16, #tpu.memory_space<vmem>>, %arg3: memref<2x1x64xf32, #tpu.memory_space<vmem>>, %arg4: memref<2x192x128xbf16, #tpu.memory_space<vmem>>, %arg5: memref<2x1x128xf32, #tpu.memory_space<vmem>>, %arg6: memref<32x128xf32, #tpu.memory_space<vmem>>) attributes {dimension_semantics = [#tpu.dimension_semantics<parallel>], iteration_bounds = array<i64: 2>, scalar_prefetch = 0 : i64, scratch_operands = 0 : i64, tpu.core_type = #tpu.core_type<tc>, window_params = [{transform_indices = @transform_0, window_bounds = array<i64: 32, 128>}, {pipeline_mode = #tpu.pipeline_mode<synchronous>, transform_indices = @transform_1, window_bounds = array<i64: 2, 128, 64>}, {pipeline_mode = #tpu.pipeline_mode<synchronous>, transform_indices = @transform_2, window_bounds = array<i64: 2, 1, 64>}, {pipeline_mode = #tpu.pipeline_mode<synchronous>, transform_indices = @transform_3, window_bounds = array<i64: 2, 192, 128>}, {pipeline_mode = #tpu.pipeline_mode<synchronous>, transform_indices = @transform_4, window_bounds = array<i64: 2, 1, 128>}, {transform_indices = @transform_5, window_bounds = array<i64: 32, 128>}]} {
    %c0 = arith.constant 0 : index
    %c0_0 = arith.constant 0 : index
    %0 = vector.load %arg1[%c0, %c0_0] : memref<32x128xf32, #tpu.memory_space<vmem>>, vector<32x128xf32>
    %1 = tpu.iota {dimensions = array<i32: 0>} : vector<32x1xi32>
    %c16_i32 = arith.constant 16 : i32
    %c0_i32 = arith.constant 0 : i32
    %2 = arith.cmpi eq, %c16_i32, %c0_i32 : i32
    %c1_i32 = arith.constant 1 : i32
    %3 = arith.select %2, %c1_i32, %c16_i32 : i32
    %4 = vector.broadcast %3 : i32 to vector<32x1xi32>
    %5 = arith.remsi %1, %4 : vector<32x1xi32>
    %c0_i32_1 = arith.constant 0 : i32
    %6 = vector.broadcast %c0_i32_1 : i32 to vector<32x1xi32>
    %7 = arith.cmpi ne, %5, %6 : vector<32x1xi32>
    %c0_i32_2 = arith.constant 0 : i32
    %8 = vector.broadcast %c0_i32_2 : i32 to vector<32x1xi32>
    %9 = arith.cmpi slt, %5, %8 : vector<32x1xi32>
    %c0_i32_3 = arith.constant 0 : i32
    %10 = arith.cmpi slt, %3, %c0_i32_3 : i32
    %11 = vector.broadcast %10 : i1 to vector<32x1xi1>
    %12 = vector.broadcast %11 : vector<32x1xi1> to vector<32x1xi1>
    %13 = arith.xori %9, %12 : vector<32x1xi1>
    %14 = arith.andi %13, %7 : vector<32x1xi1>
    %15 = vector.broadcast %3 : i32 to vector<32x1xi32>
    %16 = arith.addi %5, %15 : vector<32x1xi32>
    %17 = arith.select %14, %16, %5 : vector<32x1xi1>, vector<32x1xi32>
    %c-1_i32 = arith.constant -1 : i32
    %18 = vector.broadcast %c-1_i32 : i32 to vector<32x1xi32>
    %19 = arith.addi %17, %18 : vector<32x1xi32>
    %c0_i32_4 = arith.constant 0 : i32
    %20 = vector.broadcast %c0_i32_4 : i32 to vector<32x1xi32>
    %21 = arith.cmpi sge, %19, %20 : vector<32x1xi32>
    %c-1_i32_5 = arith.constant -1 : i32
    %22 = vector.broadcast %c-1_i32_5 : i32 to vector<32x1xi32>
    %23 = arith.addi %17, %22 : vector<32x1xi32>
    %c16_i32_6 = arith.constant 16 : i32
    %24 = vector.broadcast %c16_i32_6 : i32 to vector<32x1xi32>
    %25 = arith.cmpi slt, %23, %24 : vector<32x1xi32>
    %26 = arith.andi %21, %25 : vector<32x1xi1>
    %27 = arith.extui %26 : vector<32x1xi1> to vector<32x1xi32>
    %28 = arith.sitofp %27 : vector<32x1xi32> to vector<32x1xf32>
    %c1_i32_7 = arith.constant 1 : i32
    %29 = vector.broadcast %c1_i32_7 : i32 to vector<32x1xi32>
    %30 = arith.addi %17, %29 : vector<32x1xi32>
    %c0_i32_8 = arith.constant 0 : i32
    %31 = vector.broadcast %c0_i32_8 : i32 to vector<32x1xi32>
    %32 = arith.cmpi sge, %30, %31 : vector<32x1xi32>
    %c1_i32_9 = arith.constant 1 : i32
    %33 = vector.broadcast %c1_i32_9 : i32 to vector<32x1xi32>
    %34 = arith.addi %17, %33 : vector<32x1xi32>
    %c16_i32_10 = arith.constant 16 : i32
    %35 = vector.broadcast %c16_i32_10 : i32 to vector<32x1xi32>
    %36 = arith.cmpi slt, %34, %35 : vector<32x1xi32>
    %37 = arith.andi %32, %36 : vector<32x1xi1>
    %38 = arith.extui %37 : vector<32x1xi1> to vector<32x1xi32>
    %39 = arith.sitofp %38 : vector<32x1xi32> to vector<32x1xf32>
    %40 = arith.truncf %0 : vector<32x128xf32> to vector<32x128xbf16>
    %c0_11 = arith.constant 0 : index
    %c0_12 = arith.constant 0 : index
    %c0_13 = arith.constant 0 : index
    %41 = vector.load %arg2[%c0_11, %c0_12, %c0_13] : memref<2x128x64xbf16, #tpu.memory_space<vmem>>, vector<1x128x64xbf16>
    %42 = vector.shape_cast %41 : vector<1x128x64xbf16> to vector<128x64xbf16>
    %cst = arith.constant dense<0.000000e+00> : vector<32x64xf32>
    %43 = tpu.matmul %40, %42, %cst {dimension_numbers = #tpu.dot_dimension_numbers<[1], [0], [0], [1], [0, 0, 1, 1], [], []>} : vector<32x128xbf16>, vector<128x64xbf16>, vector<32x64xf32> -> vector<32x64xf32>
    %c0_14 = arith.constant 0 : index
    %c0_15 = arith.constant 0 : index
    %c0_16 = arith.constant 0 : index
    %44 = vector.load %arg3[%c0_14, %c0_15, %c0_16] : memref<2x1x64xf32, #tpu.memory_space<vmem>>, vector<1x1x64xf32>
    %45 = vector.shape_cast %44 : vector<1x1x64xf32> to vector<1x64xf32>
    %46 = vector.broadcast %45 : vector<1x64xf32> to vector<32x64xf32>
    %47 = arith.addf %43, %46 : vector<32x64xf32>
    %cst_17 = arith.constant 1.000000e-01 : f32
    %48 = vector.broadcast %cst_17 : f32 to vector<32x64xf32>
    %49 = arith.mulf %48, %47 : vector<32x64xf32>
    %50 = arith.maximumf %47, %49 : vector<32x64xf32>
    %51 = vector.extract_strided_slice %50 {offsets = [31, 0], sizes = [1, 64], strides = [1, 1]} : vector<32x64xf32> to vector<1x64xf32>
    %52 = vector.extract_strided_slice %50 {offsets = [0, 0], sizes = [31, 64], strides = [1, 1]} : vector<32x64xf32> to vector<31x64xf32>
    %53 = tpu.concatenate %51, %52 in 0 : vector<1x64xf32>, vector<31x64xf32> -> vector<32x64xf32>
    %54 = vector.broadcast %28 : vector<32x1xf32> to vector<32x64xf32>
    %55 = arith.mulf %53, %54 : vector<32x64xf32>
    %56 = vector.extract_strided_slice %50 {offsets = [1, 0], sizes = [31, 64], strides = [1, 1]} : vector<32x64xf32> to vector<31x64xf32>
    %57 = vector.extract_strided_slice %50 {offsets = [0, 0], sizes = [1, 64], strides = [1, 1]} : vector<32x64xf32> to vector<1x64xf32>
    %58 = tpu.concatenate %56, %57 in 0 : vector<31x64xf32>, vector<1x64xf32> -> vector<32x64xf32>
    %59 = vector.broadcast %39 : vector<32x1xf32> to vector<32x64xf32>
    %60 = arith.mulf %58, %59 : vector<32x64xf32>
    %61 = tpu.concatenate %55, %50, %60 in 1 : vector<32x64xf32>, vector<32x64xf32>, vector<32x64xf32> -> vector<32x192xf32>
    %62 = arith.truncf %61 : vector<32x192xf32> to vector<32x192xbf16>
    %c0_18 = arith.constant 0 : index
    %c0_19 = arith.constant 0 : index
    %c0_20 = arith.constant 0 : index
    %63 = vector.load %arg4[%c0_18, %c0_19, %c0_20] : memref<2x192x128xbf16, #tpu.memory_space<vmem>>, vector<1x192x128xbf16>
    %64 = vector.shape_cast %63 : vector<1x192x128xbf16> to vector<192x128xbf16>
    %cst_21 = arith.constant dense<0.000000e+00> : vector<32x128xf32>
    %65 = tpu.matmul %62, %64, %cst_21 {dimension_numbers = #tpu.dot_dimension_numbers<[1], [0], [0], [1], [0, 0, 1, 1], [], []>} : vector<32x192xbf16>, vector<192x128xbf16>, vector<32x128xf32> -> vector<32x128xf32>
    %c0_22 = arith.constant 0 : index
    %c0_23 = arith.constant 0 : index
    %c0_24 = arith.constant 0 : index
    %66 = vector.load %arg5[%c0_22, %c0_23, %c0_24] : memref<2x1x128xf32, #tpu.memory_space<vmem>>, vector<1x1x128xf32>
    %67 = vector.shape_cast %66 : vector<1x1x128xf32> to vector<1x128xf32>
    %68 = vector.broadcast %67 : vector<1x128xf32> to vector<32x128xf32>
    %69 = arith.addf %65, %68 : vector<32x128xf32>
    %cst_25 = arith.constant 1.000000e-01 : f32
    %70 = vector.broadcast %cst_25 : f32 to vector<32x128xf32>
    %71 = arith.mulf %70, %69 : vector<32x128xf32>
    %72 = arith.maximumf %69, %71 : vector<32x128xf32>
    %73 = arith.addf %0, %72 : vector<32x128xf32>
    %74 = arith.truncf %73 : vector<32x128xf32> to vector<32x128xbf16>
    %c1 = arith.constant 1 : index
    %c0_26 = arith.constant 0 : index
    %c0_27 = arith.constant 0 : index
    %75 = vector.load %arg2[%c1, %c0_26, %c0_27] : memref<2x128x64xbf16, #tpu.memory_space<vmem>>, vector<1x128x64xbf16>
    %76 = vector.shape_cast %75 : vector<1x128x64xbf16> to vector<128x64xbf16>
    %cst_28 = arith.constant dense<0.000000e+00> : vector<32x64xf32>
    %77 = tpu.matmul %74, %76, %cst_28 {dimension_numbers = #tpu.dot_dimension_numbers<[1], [0], [0], [1], [0, 0, 1, 1], [], []>} : vector<32x128xbf16>, vector<128x64xbf16>, vector<32x64xf32> -> vector<32x64xf32>
    %c1_29 = arith.constant 1 : index
    %c0_30 = arith.constant 0 : index
    %c0_31 = arith.constant 0 : index
    %78 = vector.load %arg3[%c1_29, %c0_30, %c0_31] : memref<2x1x64xf32, #tpu.memory_space<vmem>>, vector<1x1x64xf32>
    %79 = vector.shape_cast %78 : vector<1x1x64xf32> to vector<1x64xf32>
    %80 = vector.broadcast %79 : vector<1x64xf32> to vector<32x64xf32>
    %81 = arith.addf %77, %80 : vector<32x64xf32>
    %cst_32 = arith.constant 1.000000e-01 : f32
    %82 = vector.broadcast %cst_32 : f32 to vector<32x64xf32>
    %83 = arith.mulf %82, %81 : vector<32x64xf32>
    %84 = arith.maximumf %81, %83 : vector<32x64xf32>
    %85 = vector.extract_strided_slice %84 {offsets = [31, 0], sizes = [1, 64], strides = [1, 1]} : vector<32x64xf32> to vector<1x64xf32>
    %86 = vector.extract_strided_slice %84 {offsets = [0, 0], sizes = [31, 64], strides = [1, 1]} : vector<32x64xf32> to vector<31x64xf32>
    %87 = tpu.concatenate %85, %86 in 0 : vector<1x64xf32>, vector<31x64xf32> -> vector<32x64xf32>
    %88 = vector.broadcast %28 : vector<32x1xf32> to vector<32x64xf32>
    %89 = arith.mulf %87, %88 : vector<32x64xf32>
    %90 = vector.extract_strided_slice %84 {offsets = [1, 0], sizes = [31, 64], strides = [1, 1]} : vector<32x64xf32> to vector<31x64xf32>
    %91 = vector.extract_strided_slice %84 {offsets = [0, 0], sizes = [1, 64], strides = [1, 1]} : vector<32x64xf32> to vector<1x64xf32>
    %92 = tpu.concatenate %90, %91 in 0 : vector<31x64xf32>, vector<1x64xf32> -> vector<32x64xf32>
    %93 = vector.broadcast %39 : vector<32x1xf32> to vector<32x64xf32>
    %94 = arith.mulf %92, %93 : vector<32x64xf32>
    %95 = tpu.concatenate %89, %84, %94 in 1 : vector<32x64xf32>, vector<32x64xf32>, vector<32x64xf32> -> vector<32x192xf32>
    %96 = arith.truncf %95 : vector<32x192xf32> to vector<32x192xbf16>
    %c1_33 = arith.constant 1 : index
    %c0_34 = arith.constant 0 : index
    %c0_35 = arith.constant 0 : index
    %97 = vector.load %arg4[%c1_33, %c0_34, %c0_35] : memref<2x192x128xbf16, #tpu.memory_space<vmem>>, vector<1x192x128xbf16>
    %98 = vector.shape_cast %97 : vector<1x192x128xbf16> to vector<192x128xbf16>
    %cst_36 = arith.constant dense<0.000000e+00> : vector<32x128xf32>
    %99 = tpu.matmul %96, %98, %cst_36 {dimension_numbers = #tpu.dot_dimension_numbers<[1], [0], [0], [1], [0, 0, 1, 1], [], []>} : vector<32x192xbf16>, vector<192x128xbf16>, vector<32x128xf32> -> vector<32x128xf32>
    %c1_37 = arith.constant 1 : index
    %c0_38 = arith.constant 0 : index
    %c0_39 = arith.constant 0 : index
    %100 = vector.load %arg5[%c1_37, %c0_38, %c0_39] : memref<2x1x128xf32, #tpu.memory_space<vmem>>, vector<1x1x128xf32>
    %101 = vector.shape_cast %100 : vector<1x1x128xf32> to vector<1x128xf32>
    %102 = vector.broadcast %101 : vector<1x128xf32> to vector<32x128xf32>
    %103 = arith.addf %99, %102 : vector<32x128xf32>
    %cst_40 = arith.constant 1.000000e-01 : f32
    %104 = vector.broadcast %cst_40 : f32 to vector<32x128xf32>
    %105 = arith.mulf %104, %103 : vector<32x128xf32>
    %106 = arith.maximumf %103, %105 : vector<32x128xf32>
    %107 = arith.addf %73, %106 : vector<32x128xf32>
    %c0_41 = arith.constant 0 : index
    %c0_42 = arith.constant 0 : index
    %108 = vector.load %arg6[%c0_41, %c0_42] : memref<32x128xf32, #tpu.memory_space<vmem>>, vector<32x128xf32>
    tpu.vector_store %arg6[%c0_41, %c0_42], %107 {strides = array<i32>} : memref<32x128xf32, #tpu.memory_space<vmem>>, vector<32x128xf32>,
    return
  }
  func.func @transform_0(%arg0: i32) -> (i32, i32) {
    %c0_i32 = arith.constant 0 : i32
    %c0_i32_0 = arith.constant 0 : i32
    return %arg0, %c0_i32 : i32, i32
  }
  func.func @transform_1(%arg0: i32) -> (i32, i32, i32) {
    %c0_i32 = arith.constant 0 : i32
    %c0_i32_0 = arith.constant 0 : i32
    %c0_i32_1 = arith.constant 0 : i32
    %c0_i32_2 = arith.constant 0 : i32
    return %c0_i32, %c0_i32_0, %c0_i32_1 : i32, i32, i32
  }
  func.func @transform_2(%arg0: i32) -> (i32, i32, i32) {
    %c0_i32 = arith.constant 0 : i32
    %c0_i32_0 = arith.constant 0 : i32
    %c0_i32_1 = arith.constant 0 : i32
    %c0_i32_2 = arith.constant 0 : i32
    return %c0_i32, %c0_i32_0, %c0_i32_1 : i32, i32, i32
  }
  func.func @transform_3(%arg0: i32) -> (i32, i32, i32) {
    %c0_i32 = arith.constant 0 : i32
    %c0_i32_0 = arith.constant 0 : i32
    %c0_i32_1 = arith.constant 0 : i32
    %c0_i32_2 = arith.constant 0 : i32
    return %c0_i32, %c0_i32_0, %c0_i32_1 : i32, i32, i32
  }
  func.func @transform_4(%arg0: i32) -> (i32, i32, i32) {
    %c0_i32 = arith.constant 0 : i32
    %c0_i32_0 = arith.constant 0 : i32
    %c0_i32_1 = arith.constant 0 : i32
    %c0_i32_2 = arith.constant 0 : i32
    return %c0_i32, %c0_i32_0, %c0_i32_1 : i32, i32, i32
  }
  func.func @transform_5(%arg0: i32) -> (i32, i32) {
    %c0_i32 = arith.constant 0 : i32
    %c0_i32_0 = arith.constant 0 : i32
    return %arg0, %c0_i32 : i32, i32
  }
}

</mosaic_0001>

<llo_original>
// kernel: tpu_custom_call.1
$region0: #{tpu_custom_call.1}
  #allocation0 [shape = 'u32[]', space=smem, size = 0x4, offset = 0x4, fixed_abs, tag = 'smem constant byte address 0x4 - core index']
  #allocation1 [shape = 'u32[144,128]{1,0:T(1,128)}', space=vmem, size = 0x12000, scoped, tag = 'internal scratch']
  %s0 = inlined_call_operand.hbm [shape: f32[64,128], index: 0, kind: input, shape index: {}]
  %s1 = inlined_call_operand.vmem [shape: bf16[2,128,64], index: 1, kind: input, shape index: {}]
  %s2 = inlined_call_operand.vmem [shape: f32[2,1,64], index: 2, kind: input, shape index: {}]
  %s3 = inlined_call_operand.vmem [shape: bf16[2,192,128], index: 3, kind: input, shape index: {}]
  %s4 = inlined_call_operand.vmem [shape: f32[2,1,128], index: 4, kind: input, shape index: {}]
  %s5 = inlined_call_operand.hbm [shape: f32[64,128], index: 5, kind: output, shape index: {}]
  %s6 = sld [smem:[#allocation0]]
  $region57: #{tpu_custom_call.1} parent=0
    _
  %s8 = ssub.s32 1, %s6
  %s9 = scalar_select 0, %s8, %s6
  $region1: #{tpu_custom_call.1} parent=0
    #allocation2 [shape = 'u8[32768]{0}', space=vmem, size = 0x8000, scoped, tag = 'input window, operand 0']
    #allocation3 [shape = 's32[2]{0}', space=sflag, size = 0x8, scoped, tag = 'scoped memory for tpu_custom_call.1']
    #allocation4 [shape = 's32[2]{0}', space=sflag, size = 0x8, scoped, tag = 'scoped memory for tpu_custom_call.1']
    #allocation5 [shape = 'u8[32768]{0}', space=vmem, size = 0x8000, scoped, tag = 'output window, operand 0']
    %10 = vsyncpa [#allocation3], 0
    %s11 = scalar_lea.sflag [#allocation3], 1
    %12 = vsyncpa %s11, 0
    %13 = vsyncpa [#allocation4], 0
    %s14 = scalar_lea.sflag [#allocation4], 1
    %15 = vsyncpa %s14, 0
    loop: start=0, step=1, limit=4
    $region2: #{tpu_custom_call.1} parent=1 // loop_pre_header
      _
    $region3: #{tpu_custom_call.1} parent=1 // loop_header
      %s17 = sphi 0, %s21
      %p18 = scmp.ge.s32.totalorder %s17, 4
      %s27 = sphi 0, %s29
      %s30 = sphi 0, %s27
      %s31 = sphi 0, %s30
      %s47 = sphi 0, %s31
      %s51 = sphi 0, %s51
      %s53 = sphi 0, %s51
      %s54 = sphi 0, %s53
      %s68 = sphi 0, %s54
      %s72 = sphi 0, %s72
      %s74 = sphi 0, %s72
      %s75 = sphi 0, %s74
      %s89 = sphi 0, %s75
      %s93 = sphi 0, %s93
      %s95 = sphi 0, %s93
      %s96 = sphi 0, %s95
      %s110 = sphi 0, %s96
      %s114 = sphi 0, %s114
      %s116 = sphi 0, %s114
      %s117 = sphi 0, %s116
      %s131 = sphi 0, %s117
      %s137 = sphi 0, %s139
      %s140 = sphi 0, %s137
      %s141 = sphi 0, %s140
      %s157 = sphi 0, %s141
    $region4: #{tpu_custom_call.1} parent=1 // loop_header_branch
      %20 = sbr.rel (%p18) target = $region8
    $region5: #{tpu_custom_call.1} parent=1 // loop_body
      %s22 = ssub.s32 %s17, 1
      %s23 = ssub.s32 %s17, 2
      %s24 = sadd.s32 %s17, 1
      %s25 = ssub.s32 %s17, %s24
      %p26 = scmp.eq.s32.totalorder %s25, 0
      %s28 = sadd.s32 %s27, 1
      %s29 = scalar_select %p26, %s27, %s28
      %p32 = pneg %p26
      %p33 = scmp.eq.s32.totalorder %s17, 1
      %p34 = por %p32, %p33
      %p35 = scmp.ne.s32.totalorder %s27, %s30
      %p36 = scmp.eq.s32.totalorder %s17, 0
      %p37 = por %p35, %p36
      %p38 = scmp.ne.s32.totalorder %s27, %s30
      %p39 = scmp.eq.s32.totalorder %s22, 1
      %p40 = por %p38, %p39
      %p41 = scmp.ne.s32.totalorder %s30, %s31
      %p42 = scmp.eq.s32.totalorder %s22, 0
      %p43 = por %p41, %p42
      %p44 = scmp.ne.s32.totalorder %s30, %s31
      %p45 = scmp.eq.s32.totalorder %s23, 1
      %p46 = por %p44, %p45
      %p48 = scmp.ne.s32.totalorder %s31, %s47
      %p49 = scmp.eq.s32.totalorder %s23, 0
      %p50 = por %p48, %p49
      %s52 = sadd.s32 %s51, 1
      %p55 = scmp.eq.s32.totalorder %s17, 1
      %p56 = scmp.ne.s32.totalorder %s51, %s53
      %p57 = scmp.eq.s32.totalorder %s17, 0
      %p58 = por %p56, %p57
      %p59 = scmp.ne.s32.totalorder %s51, %s53
      %p60 = scmp.eq.s32.totalorder %s22, 1
      %p61 = por %p59, %p60
      %p62 = scmp.ne.s32.totalorder %s53, %s54
      %p63 = scmp.eq.s32.totalorder %s22, 0
      %p64 = por %p62, %p63
      %p65 = scmp.ne.s32.totalorder %s53, %s54
      %p66 = scmp.eq.s32.totalorder %s23, 1
      %p67 = por %p65, %p66
      %p69 = scmp.ne.s32.totalorder %s54, %s68
      %p70 = scmp.eq.s32.totalorder %s23, 0
      %p71 = por %p69, %p70
      %s73 = sadd.s32 %s72, 1
      %p76 = scmp.eq.s32.totalorder %s17, 1
      %p77 = scmp.ne.s32.totalorder %s72, %s74
      %p78 = scmp.eq.s32.totalorder %s17, 0
      %p79 = por %p77, %p78
      %p80 = scmp.ne.s32.totalorder %s72, %s74
      %p81 = scmp.eq.s32.totalorder %s22, 1
      %p82 = por %p80, %p81
      %p83 = scmp.ne.s32.totalorder %s74, %s75
      %p84 = scmp.eq.s32.totalorder %s22, 0
      %p85 = por %p83, %p84
      %p86 = scmp.ne.s32.totalorder %s74, %s75
      %p87 = scmp.eq.s32.totalorder %s23, 1
      %p88 = por %p86, %p87
      %p90 = scmp.ne.s32.totalorder %s75, %s89
      %p91 = scmp.eq.s32.totalorder %s23, 0
      %p92 = por %p90, %p91
      %s94 = sadd.s32 %s93, 1
      %p97 = scmp.eq.s32.totalorder %s17, 1
      %p98 = scmp.ne.s32.totalorder %s93, %s95
      %p99 = scmp.eq.s32.totalorder %s17, 0
      %p100 = por %p98, %p99
      %p101 = scmp.ne.s32.totalorder %s93, %s95
      %p102 = scmp.eq.s32.totalorder %s22, 1
      %p103 = por %p101, %p102
      %p104 = scmp.ne.s32.totalorder %s95, %s96
      %p105 = scmp.eq.s32.totalorder %s22, 0
      %p106 = por %p104, %p105
      %p107 = scmp.ne.s32.totalorder %s95, %s96
      %p108 = scmp.eq.s32.totalorder %s23, 1
      %p109 = por %p107, %p108
      %p111 = scmp.ne.s32.totalorder %s96, %s110
      %p112 = scmp.eq.s32.totalorder %s23, 0
      %p113 = por %p111, %p112
      %s115 = sadd.s32 %s114, 1
      %p118 = scmp.eq.s32.totalorder %s17, 1
      %p119 = scmp.ne.s32.totalorder %s114, %s116
      %p120 = scmp.eq.s32.totalorder %s17, 0
      %p121 = por %p119, %p120
      %p122 = scmp.ne.s32.totalorder %s114, %s116
      %p123 = scmp.eq.s32.totalorder %s22, 1
      %p124 = por %p122, %p123
      %p125 = scmp.ne.s32.totalorder %s116, %s117
      %p126 = scmp.eq.s32.totalorder %s22, 0
      %p127 = por %p125, %p126
      %p128 = scmp.ne.s32.totalorder %s116, %s117
      %p129 = scmp.eq.s32.totalorder %s23, 1
      %p130 = por %p128, %p129
      %p132 = scmp.ne.s32.totalorder %s117, %s131
      %p133 = scmp.eq.s32.totalorder %s23, 0
      %p134 = por %p132, %p133
      %s135 = ssub.s32 %s17, %s24
      %p136 = scmp.eq.s32.totalorder %s135, 0
      %s138 = sadd.s32 %s137, 1
      %s139 = scalar_select %p136, %s137, %s138
      %p142 = pneg %p136
      %p143 = scmp.eq.s32.totalorder %s17, 1
      %p144 = por %p142, %p143
      %p145 = scmp.ne.s32.totalorder %s137, %s140
      %p146 = scmp.eq.s32.totalorder %s17, 0
      %p147 = por %p145, %p146
      %p148 = scmp.ne.s32.totalorder %s137, %s140
      %p149 = scmp.eq.s32.totalorder %s22, 1
      %p150 = por %p148, %p149
      %p151 = scmp.ne.s32.totalorder %s140, %s141
      %p152 = scmp.eq.s32.totalorder %s22, 0
      %p153 = por %p151, %p152
      %p154 = scmp.ne.s32.totalorder %s140, %s141
      %p155 = scmp.eq.s32.totalorder %s23, 1
      %p156 = por %p154, %p155
      %p158 = scmp.ne.s32.totalorder %s141, %s157
      %p159 = scmp.eq.s32.totalorder %s23, 0
      %p160 = por %p158, %p159
      %p161 = scmp.le.s32.totalorder 1, %s17
      %p162 = scmp.lt.s32.totalorder %s17, 3
      %p163 = pnand %p161, %p162
      %p164 = pneg %p163
      // Predicated region
      $region9: #{tpu_custom_call.1} parent=5 // pred_check
        _
      $region10: #{tpu_custom_call.1} parent=5 // pred_check_branch
        %166 = sbr.rel (%p163) target = $region12
      $region11: #{tpu_custom_call.1} parent=5 // pred_region
        %s167 = ssub.s32 %s17, 1
        // Predicated region
        $region13: #{tpu_custom_call.1} parent=11 // pred_check
          %p168 = pneg %p64
        $region14: #{tpu_custom_call.1} parent=11 // pred_check_branch
          %170 = sbr.rel (%p168) target = $region16
        $region15: #{tpu_custom_call.1} parent=11 // pred_region
          _
        $region16: #{tpu_custom_call.1} parent=11 // pred_fallthru
          _
        // Predicated region
        $region17: #{tpu_custom_call.1} parent=11 // pred_check
          %p171 = pneg %p85
        $region18: #{tpu_custom_call.1} parent=11 // pred_check_branch
          %173 = sbr.rel (%p171) target = $region20
        $region19: #{tpu_custom_call.1} parent=11 // pred_region
          _
        $region20: #{tpu_custom_call.1} parent=11 // pred_fallthru
          _
        // Predicated region
        $region21: #{tpu_custom_call.1} parent=11 // pred_check
          %p174 = pneg %p106
        $region22: #{tpu_custom_call.1} parent=11 // pred_check_branch
          %176 = sbr.rel (%p174) target = $region24
        $region23: #{tpu_custom_call.1} parent=11 // pred_region
          _
        $region24: #{tpu_custom_call.1} parent=11 // pred_fallthru
          _
        // Predicated region
        $region25: #{tpu_custom_call.1} parent=11 // pred_check
          %p177 = pneg %p127
        $region26: #{tpu_custom_call.1} parent=11 // pred_check_branch
          %179 = sbr.rel (%p177) target = $region28
        $region27: #{tpu_custom_call.1} parent=11 // pred_region
          _
        $region28: #{tpu_custom_call.1} parent=11 // pred_fallthru
          _
      $region12: #{tpu_custom_call.1} parent=5 // pred_fallthru
        _
      %p180 = scmp.lt.s32.totalorder %s17, 2
      // Predicated region
      $region29: #{tpu_custom_call.1} parent=5 // pred_check
        %p181 = pneg %p180
      $region30: #{tpu_custom_call.1} parent=5 // pred_check_branch
        %183 = sbr.rel (%p181) target = $region32
      $region31: #{tpu_custom_call.1} parent=5 // pred_region
        // Predicated region
        $region33: #{tpu_custom_call.1} parent=31 // pred_check
          %p184 = pneg %p37
        $region34: #{tpu_custom_call.1} parent=31 // pred_check_branch
          %186 = sbr.rel (%p184) target = $region36
        $region35: #{tpu_custom_call.1} parent=31 // pred_region
          %s187 = sand.u32 %s27, 1
          %s188 = scalar_lea.sflag [#allocation3], %s187
          %s189 = sand.u32 %s27, 1
          %s190 = smul.addr %s189, 32
          %s191 = scalar_lea.vmem [#allocation2], %s190
          %s192 = smul.u32 4, %s17
          %s194 = ssub.s32 512, 512
          %195 = vsyncadd %s188, %s194
          %s196 = smul.addr %s192, 128
          %s197 = scalar_lea.hbm %s0, %s196
          %s198 = sshll.u32 %s191, 4
          %s199 = int_to_ptr.vmem [resolvable:$true] %s198
          %204 = dma.hbm_to_vmem [thread:$0]  %s197, 512, %s199, %s188, 128, 128, 8
        $region36: #{tpu_custom_call.1} parent=31 // pred_fallthru
          _
      $region32: #{tpu_custom_call.1} parent=5 // pred_fallthru
        _
      %p205 = scmp.le.s32.totalorder 1, %s17
      %p206 = scmp.lt.s32.totalorder %s17, 3
      %p207 = pnand %p205, %p206
      %p208 = pneg %p207
      // Predicated region
      $region37: #{tpu_custom_call.1} parent=5 // pred_check
        _
      $region38: #{tpu_custom_call.1} parent=5 // pred_check_branch
        %210 = sbr.rel (%p207) target = $region40
      $region39: #{tpu_custom_call.1} parent=5 // pred_region
        %s211 = ssub.s32 %s17, 1
        %s212 = sand.u32 %s30, 1
        %s213 = scalar_lea.sflag [#allocation3], %s212
        %s214 = sand.u32 %s30, 1
        %s215 = smul.addr %s214, 32
        %s216 = scalar_lea.vmem [#allocation2], %s215
        // Predicated region
        $region41: #{tpu_custom_call.1} parent=39 // pred_check
          %p217 = pneg %p43
        $region42: #{tpu_custom_call.1} parent=39 // pred_check_branch
          %219 = sbr.rel (%p217) target = $region44
        $region43: #{tpu_custom_call.1} parent=39 // pred_region
          %220 = dma.done %s213, 512
        $region44: #{tpu_custom_call.1} parent=39 // pred_fallthru
          _
        %s221 = sand.u32 %s30, 1
        %s222 = scalar_lea.sflag [#allocation3], %s221
        %s223 = sand.u32 %s30, 1
        %s224 = smul.addr %s223, 32
        %s225 = scalar_lea.vmem [#allocation2], %s224
        %p226 = pneg %p43
        %p227 = pneg %p40
        %p228 = pneg %p64
        %p229 = pneg %p61
        %p230 = pneg %p85
        %p231 = pneg %p82
        %p232 = pneg %p106
        %p233 = pneg %p103
        %p234 = pneg %p127
        %p235 = pneg %p124
        %p236 = pneg %p153
        %p237 = pneg %p150
        %s238 = sand.u32 %s140, 1
        %s239 = scalar_lea.sflag [#allocation4], %s238
        %s240 = sand.u32 %s140, 1
        %s241 = smul.addr %s240, 32
        %s242 = scalar_lea.vmem [#allocation5], %s241
        %s243 = smul.u32 4, %s22
        %s244 = smul.u32 4, %s22
        %v246 = vld [vmem:[%s216] sm:$0xff]
        %v247 = vld [vmem:[%s216 + $0x8] sm:$0xff]
        %v248 = vld [vmem:[%s216 + $0x10] sm:$0xff]
        %v249 = vld [vmem:[%s216 + $0x18] sm:$0xff]
        %v250 = vlaneseq
        %v251 = vshrl.u32 %v250, 7
        %v252 = vadd.s32 %v251, 8
        %v253 = vadd.s32 %v251, 16
        %v254 = vadd.s32 %v251, 24
        %vm255 = vcmp.lt.s32.totalorder %v251, 0
        %v256 = vsub.s32 0, %v251
        %v257 = vsel %vm255, %v256, %v251
        %v258 = vshrl.u32 %v257, 4
        %v259 = vand.u32 %v257, 15
        %v260 = vsub.s32 0, %v259
        %v261 = vsel %vm255, %v260, %v259
        %vm262 = vcmp.lt.s32.totalorder %v252, 0
        %v263 = vsub.s32 0, %v252
        %v264 = vsel %vm262, %v263, %v252
        %v265 = vshrl.u32 %v264, 4
        %v266 = vand.u32 %v264, 15
        %v267 = vsub.s32 0, %v266
        %v268 = vsel %vm262, %v267, %v266
        %vm269 = vcmp.lt.s32.totalorder %v253, 0
        %v270 = vsub.s32 0, %v253
        %v271 = vsel %vm269, %v270, %v253
        %v272 = vshrl.u32 %v271, 4
        %v273 = vand.u32 %v271, 15
        %v274 = vsub.s32 0, %v273
        %v275 = vsel %vm269, %v274, %v273
        %vm276 = vcmp.lt.s32.totalorder %v254, 0
        %v277 = vsub.s32 0, %v254
        %v278 = vsel %vm276, %v277, %v254
        %v279 = vshrl.u32 %v278, 4
        %v280 = vand.u32 %v278, 15
        %v281 = vsub.s32 0, %v280
        %v282 = vsel %vm276, %v281, %v280
        %vm283 = vcmp.ne.s32.totalorder %v261, 0
        %vm284 = vcmp.ne.s32.totalorder %v268, 0
        %vm285 = vcmp.ne.s32.totalorder %v275, 0
        %vm286 = vcmp.ne.s32.totalorder %v282, 0
        %vm287 = vcmp.lt.s32.totalorder %v261, 0
        %vm288 = vcmp.lt.s32.totalorder %v268, 0
        %vm289 = vcmp.lt.s32.totalorder %v275, 0
        %vm290 = vcmp.lt.s32.totalorder %v282, 0
        %vm291 = vmand %vm287, %vm283
        %vm292 = vmand %vm288, %vm284
        %vm293 = vmand %vm289, %vm285
        %vm294 = vmand %vm290, %vm286
        %v295 = vadd.s32 %v261, 16
        %v296 = vadd.s32 %v268, 16
        %v297 = vadd.s32 %v275, 16
        %v298 = vadd.s32 %v282, 16
        %v299 = vsel %vm291, %v295, %v261
        %v300 = vsel %vm292, %v296, %v268
        %v301 = vsel %vm293, %v297, %v275
        %v302 = vsel %vm294, %v298, %v282
        %v303 = vadd.s32 %v299, 4294967295
        %v304 = vadd.s32 %v300, 4294967295
        %v305 = vadd.s32 %v301, 4294967295
        %v306 = vadd.s32 %v302, 4294967295
        %vm307 = vcmp.ge.s32.totalorder %v303, 0
        %vm308 = vcmp.ge.s32.totalorder %v304, 0
        %vm309 = vcmp.ge.s32.totalorder %v305, 0
        %vm310 = vcmp.ge.s32.totalorder %v306, 0
        %vm311 = vcmp.lt.s32.totalorder %v303, 16
        %vm312 = vcmp.lt.s32.totalorder %v304, 16
        %vm313 = vcmp.lt.s32.totalorder %v305, 16
        %vm314 = vcmp.lt.s32.totalorder %v306, 16
        %vm315 = vmand %vm307, %vm311
        %vm316 = vmand %vm308, %vm312
        %vm317 = vmand %vm309, %vm313
        %vm318 = vmand %vm310, %vm314
        %v319 = vsel %vm315, 1, 0
        %v320 = vsel %vm316, 1, 0
        %v321 = vsel %vm317, 1, 0
        %v322 = vsel %vm318, 1, 0
        %v323 = vcvt.s32.f32 %v319
        %v324 = vcvt.s32.f32 %v320
        %v325 = vcvt.s32.f32 %v321
        %v326 = vcvt.s32.f32 %v322
        %v327 = vadd.s32 %v299, 1
        %v328 = vadd.s32 %v300, 1
        %v329 = vadd.s32 %v301, 1
        %v330 = vadd.s32 %v302, 1
        %vm331 = vcmp.ge.s32.totalorder %v327, 0
        %vm332 = vcmp.ge.s32.totalorder %v328, 0
        %vm333 = vcmp.ge.s32.totalorder %v329, 0
        %vm334 = vcmp.ge.s32.totalorder %v330, 0
        %vm335 = vcmp.lt.s32.totalorder %v327, 16
        %vm336 = vcmp.lt.s32.totalorder %v328, 16
        %vm337 = vcmp.lt.s32.totalorder %v329, 16
        %vm338 = vcmp.lt.s32.totalorder %v330, 16
        %vm339 = vmand %vm331, %vm335
        %vm340 = vmand %vm332, %vm336
        %vm341 = vmand %vm333, %vm337
        %vm342 = vmand %vm334, %vm338
        %v343 = vsel %vm339, 1, 0
        %v344 = vsel %vm340, 1, 0
        %v345 = vsel %vm341, 1, 0
        %v346 = vsel %vm342, 1, 0
        %v347 = vcvt.s32.f32 %v343
        %v348 = vcvt.s32.f32 %v344
        %v349 = vcvt.s32.f32 %v345
        %v350 = vcvt.s32.f32 %v346
        %v351 = vpack.c.bf16 %v247, %v246
        %v352 = vpack.c.bf16 %v249, %v248
        %v353 = vld [vmem:[%s1] sm:$0xf]
        %v354 = vld [vmem:[%s1 + $0x4] sm:$0xf]
        %v355 = vld [vmem:[%s1 + $0x8] sm:$0xf]
        %v356 = vld [vmem:[%s1 + $0xc] sm:$0xf]
        %v357 = vld [vmem:[%s1 + $0x10] sm:$0xf]
        %v358 = vld [vmem:[%s1 + $0x14] sm:$0xf]
        %v359 = vld [vmem:[%s1 + $0x18] sm:$0xf]
        %v360 = vld [vmem:[%s1 + $0x1c] sm:$0xf]
        %v361 = vld [vmem:[%s1 + $0x20] sm:$0xf]
        %v362 = vld [vmem:[%s1 + $0x24] sm:$0xf]
        %v363 = vld [vmem:[%s1 + $0x28] sm:$0xf]
        %v364 = vld [vmem:[%s1 + $0x2c] sm:$0xf]
        %v365 = vld [vmem:[%s1 + $0x30] sm:$0xf]
        %v366 = vld [vmem:[%s1 + $0x34] sm:$0xf]
        %v367 = vld [vmem:[%s1 + $0x38] sm:$0xf]
        %v368 = vld [vmem:[%s1 + $0x3c] sm:$0xf]
        %v369 = vld [vmem:[%s2] sm:$0x1]
        %v371 = vlaneseq
        %v372 = vshrl.u32 %v371, 7
        %v373 = vsub.s32 0, %v372
        %v374 = vrot.slane %v369, %v373
        %v392 = vunpack.c.l.b16 %v353
        %v393 = vunpack.c.l.b16 %v354
        %v394 = vunpack.c.l.b16 %v355
        %v395 = vunpack.c.l.b16 %v356
        %v396 = vunpack.c.l.b16 %v357
        %v397 = vunpack.c.l.b16 %v358
        %v398 = vunpack.c.l.b16 %v359
        %v399 = vunpack.c.l.b16 %v360
        %v400 = vunpack.c.l.b16 %v361
        %v401 = vunpack.c.l.b16 %v362
        %v402 = vunpack.c.l.b16 %v363
        %v403 = vunpack.c.l.b16 %v364
        %v404 = vunpack.c.l.b16 %v365
        %v405 = vunpack.c.l.b16 %v366
        %v406 = vunpack.c.l.b16 %v367
        %v407 = vunpack.c.l.b16 %v368
        %v408 = vpack.c.b16 %v393, %v392
        %v409 = vpack.c.b16 %v395, %v394
        %v410 = vpack.c.b16 %v397, %v396
        %v411 = vpack.c.b16 %v399, %v398
        %v412 = vpack.c.b16 %v401, %v400
        %v413 = vpack.c.b16 %v403, %v402
        %v414 = vpack.c.b16 %v405, %v404
        %v415 = vpack.c.b16 %v407, %v406
        %424 = vmatprep.subr.bf16.mxu0 0
        %425 = vmatpush1.bf16.msra.mxu0 %v408
        %426 = vmatprep.subr.bf16.mxu0 0
        %427 = vmatpush1.bf16.msra.mxu0 %v409
        %428 = vmatprep.subr.bf16.mxu0 0
        %429 = vmatpush1.bf16.msra.mxu0 %v410
        %430 = vmatprep.subr.bf16.mxu0 0
        %431 = vmatpush1.bf16.msra.mxu0 %v411
        %432 = vmatprep.subr.bf16.mxu0 0
        %433 = vmatpush1.bf16.msra.mxu0 %v412
        %434 = vmatprep.subr.bf16.mxu0 0
        %435 = vmatpush1.bf16.msra.mxu0 %v413
        %436 = vmatprep.subr.bf16.mxu0 0
        %437 = vmatpush1.bf16.msra.mxu0 %v414
        %438 = vmatprep.subr.bf16.mxu0 0
        %439 = vmatpush1.bf16.msra.mxu0 %v415
        %440 = vmatprep.subr.bf16.mxu0 0
        %441 = vmatpush1.bf16.msra.mxu0 0
        %442 = vmatprep.subr.bf16.mxu0 0
        %443 = vmatpush1.bf16.msra.mxu0 0
        %444 = vmatprep.subr.bf16.mxu0 0
        %445 = vmatpush1.bf16.msra.mxu0 0
        %446 = vmatprep.subr.bf16.mxu0 0
        %447 = vmatpush1.bf16.msra.mxu0 0
        %448 = vmatprep.subr.bf16.mxu0 0
        %449 = vmatpush1.bf16.msra.mxu0 0
        %450 = vmatprep.subr.bf16.mxu0 0
        %451 = vmatpush1.bf16.msra.mxu0 0
        %452 = vmatprep.subr.bf16.mxu0 0
        %453 = vmatpush1.bf16.msra.mxu0 0
        %454 = vmatprep.subr.bf16.mxu0 0
        %455 = vmatpush1.bf16.msra.mxu0 0
        %456 = vmatprep.mubr.bf16.mxu0 0
        %457 = vmatmul.mubr.bf16.gmra.mrb[0].mxu0 %v351
        %v458 = vpop.f32.mrb[0].mxu0
        %v459 = vadd.f32 %v374, %v458
        %v460 = vpop.f32.mrb[0].mxu0
        %v461 = vpop.f32.mrb[0].mxu0
        %v462 = vadd.f32 %v374, %v461
        %v463 = vpop.f32.mrb[0].mxu0
        %464 = vmatprep.mubr.bf16.mxu0 0
        %465 = vmatmul.mubr.bf16.gmra.mrb[0].mxu0 %v352
        %v466 = vpop.f32.mrb[0].mxu0
        %v467 = vadd.f32 %v374, %v466
        %v468 = vpop.f32.mrb[0].mxu0
        %v469 = vpop.f32.mrb[0].mxu0
        %v470 = vadd.f32 %v374, %v469
        %v471 = vpop.f32.mrb[0].mxu0
        %472 = vdwg.mxu0
        %v473 = vmul.f32 %v459, 0.1
        %v474 = vmul.f32 %v462, 0.1
        %v475 = vmul.f32 %v467, 0.1
        %v476 = vmul.f32 %v470, 0.1
        %v477 = vmax.f32 %v459, %v473
        %v478 = vmax.f32 %v462, %v474
        %v479 = vmax.f32 %v467, %v475
        %v480 = vmax.f32 %v470, %v476
        %v482 = vrot.slane %v480, 7
        %vm487 = vcmask 1040384
        %v488 = vrot.slane %v477, 7
        %v489 = vrot.slane %v478, 7
        %v490 = vsel %vm487, %v488, %v489
        %v491 = vrot.slane %v479, 7
        %v492 = vsel %vm487, %v489, %v491
        %v493 = vsel %vm487, %v491, %v482
        %v498 = vsel %vm487, %v482, %v488
        %v499 = vmul.f32 %v498, %v323
        %v500 = vmul.f32 %v490, %v324
        %v501 = vmul.f32 %v492, %v325
        %v502 = vmul.f32 %v493, %v326
        %vm503 = vcmask 1046528
        %v504 = vrot.slane %v477, 1
        %v505 = vrot.slane %v478, 1
        %v506 = vsel %vm503, %v504, %v505
        %v507 = vrot.slane %v479, 1
        %v508 = vsel %vm503, %v505, %v507
        %v509 = vrot.slane %v480, 1
        %v510 = vsel %vm503, %v507, %v509
        %v516 = vsel %vm503, %v509, %v504
        %v517 = vmul.f32 %v506, %v347
        %v518 = vmul.f32 %v508, %v348
        %v519 = vmul.f32 %v510, %v349
        %v520 = vmul.f32 %v516, %v350
        %521 = vrot.lane.b32.xlu0 %v477, 64
        %v522 = vpop.permute.xlu0 %521
        %523 = vrot.lane.b32.xlu0 %v478, 64
        %v524 = vpop.permute.xlu0 %523
        %525 = vrot.lane.b32.xlu0 %v479, 64
        %v526 = vpop.permute.xlu0 %525
        %527 = vrot.lane.b32.xlu0 %v480, 64
        %v528 = vpop.permute.xlu0 %527
        %vm533 = vcmask 523264
        %v534 = vsel %vm533, %v499, %v522
        %v535 = vsel %vm533, %v500, %v524
        %v536 = vsel %vm533, %v501, %v526
        %v537 = vsel %vm533, %v502, %v528
        %v538 = vpack.c.bf16 %v535, %v534
        %v539 = vpack.c.bf16 %v518, %v517
        %v540 = vpack.c.bf16 %v537, %v536
        %v541 = vpack.c.bf16 %v520, %v519
        %v542 = vld [vmem:[%s3] sm:$0xf]
        %v543 = vld [vmem:[%s3 + $0x4] sm:$0xf]
        %v544 = vld [vmem:[%s3 + $0x8] sm:$0xf]
        %v545 = vld [vmem:[%s3 + $0xc] sm:$0xf]
        %v546 = vld [vmem:[%s3 + $0x10] sm:$0xf]
        %v547 = vld [vmem:[%s3 + $0x14] sm:$0xf]
        %v548 = vld [vmem:[%s3 + $0x18] sm:$0xf]
        %v549 = vld [vmem:[%s3 + $0x1c] sm:$0xf]
        %v550 = vld [vmem:[%s3 + $0x20] sm:$0xf]
        %v551 = vld [vmem:[%s3 + $0x24] sm:$0xf]
        %v552 = vld [vmem:[%s3 + $0x28] sm:$0xf]
        %v553 = vld [vmem:[%s3 + $0x2c] sm:$0xf]
        %v554 = vld [vmem:[%s3 + $0x30] sm:$0xf]
        %v555 = vld [vmem:[%s3 + $0x34] sm:$0xf]
        %v556 = vld [vmem:[%s3 + $0x38] sm:$0xf]
        %v557 = vld [vmem:[%s3 + $0x3c] sm:$0xf]
        %v558 = vld [vmem:[%s3 + $0x40] sm:$0xf]
        %v559 = vld [vmem:[%s3 + $0x44] sm:$0xf]
        %v560 = vld [vmem:[%s3 + $0x48] sm:$0xf]
        %v561 = vld [vmem:[%s3 + $0x4c] sm:$0xf]
        %v562 = vld [vmem:[%s3 + $0x50] sm:$0xf]
        %v563 = vld [vmem:[%s3 + $0x54] sm:$0xf]
        %v564 = vld [vmem:[%s3 + $0x58] sm:$0xf]
        %v565 = vld [vmem:[%s3 + $0x5c] sm:$0xf]
        %v566 = vld [vmem:[%s4] sm:$0x1]
        %v568 = vlaneseq
        %v569 = vshrl.u32 %v568, 7
        %v570 = vsub.s32 0, %v569
        %v571 = vrot.slane %v566, %v570
        %v597 = vunpack.c.l.b16 %v542
        %v598 = vunpack.c.l.b16 %v543
        %v599 = vunpack.c.l.b16 %v544
        %v600 = vunpack.c.l.b16 %v545
        %v601 = vunpack.c.l.b16 %v546
        %v602 = vunpack.c.l.b16 %v547
        %v603 = vunpack.c.l.b16 %v548
        %v604 = vunpack.c.l.b16 %v549
        %v605 = vunpack.c.l.b16 %v550
        %v606 = vunpack.c.l.b16 %v551
        %v607 = vunpack.c.l.b16 %v552
        %v608 = vunpack.c.l.b16 %v553
        %v609 = vunpack.c.l.b16 %v554
        %v610 = vunpack.c.l.b16 %v555
        %v611 = vunpack.c.l.b16 %v556
        %v612 = vunpack.c.l.b16 %v557
        %v613 = vunpack.c.l.b16 %v558
        %v614 = vunpack.c.l.b16 %v559
        %v615 = vunpack.c.l.b16 %v560
        %v616 = vunpack.c.l.b16 %v561
        %v617 = vunpack.c.l.b16 %v562
        %v618 = vunpack.c.l.b16 %v563
        %v619 = vunpack.c.l.b16 %v564
        %v620 = vunpack.c.l.b16 %v565
        %v621 = vpack.c.b16 %v598, %v597
        %v622 = vpack.c.b16 %v600, %v599
        %v623 = vpack.c.b16 %v602, %v601
        %v624 = vpack.c.b16 %v604, %v603
        %v625 = vpack.c.b16 %v606, %v605
        %v626 = vpack.c.b16 %v608, %v607
        %v627 = vpack.c.b16 %v610, %v609
        %v628 = vpack.c.b16 %v612, %v611
        %v629 = vpack.c.b16 %v614, %v613
        %v630 = vpack.c.b16 %v616, %v615
        %v631 = vpack.c.b16 %v618, %v617
        %v632 = vpack.c.b16 %v620, %v619
        %v646 = vsel %vm533, %v539, 0
        %v649 = vsel %vm533, %v541, 0
        %651 = vmatprep.subr.bf16.mxu0 0
        %652 = vmatpush1.bf16.msra.mxu0 %v621
        %653 = vmatprep.subr.bf16.mxu0 0
        %654 = vmatpush1.bf16.msra.mxu0 %v622
        %655 = vmatprep.subr.bf16.mxu0 0
        %656 = vmatpush1.bf16.msra.mxu0 %v623
        %657 = vmatprep.subr.bf16.mxu0 0
        %658 = vmatpush1.bf16.msra.mxu0 %v624
        %659 = vmatprep.subr.bf16.mxu0 0
        %660 = vmatpush1.bf16.msra.mxu0 %v625
        %661 = vmatprep.subr.bf16.mxu0 0
        %662 = vmatpush1.bf16.msra.mxu0 %v626
        %663 = vmatprep.subr.bf16.mxu0 0
        %664 = vmatpush1.bf16.msra.mxu0 %v627
        %665 = vmatprep.subr.bf16.mxu0 0
        %666 = vmatpush1.bf16.msra.mxu0 %v628
        %667 = vmatprep.subr.bf16.mxu0 0
        %668 = vmatpush1.bf16.msra.mxu0 %v629
        %669 = vmatprep.subr.bf16.mxu0 0
        %670 = vmatpush1.bf16.msra.mxu0 %v630
        %671 = vmatprep.subr.bf16.mxu0 0
        %672 = vmatpush1.bf16.msra.mxu0 %v631
        %673 = vmatprep.subr.bf16.mxu0 0
        %674 = vmatpush1.bf16.msra.mxu0 %v632
        %675 = vmatprep.subr.bf16.mxu0 0
        %676 = vmatpush1.bf16.msra.mxu0 0
        %677 = vmatprep.subr.bf16.mxu0 0
        %678 = vmatpush1.bf16.msra.mxu0 0
        %679 = vmatprep.subr.bf16.mxu0 0
        %680 = vmatpush1.bf16.msra.mxu0 0
        %681 = vmatprep.subr.bf16.mxu0 0
        %682 = vmatpush1.bf16.msra.mxu0 0
        %683 = vmatprep.mubr.bf16.mxu0 %v646
        %684 = vmatmul.mubr.bf16.gmra.mrb[0].mxu0 %v538
        %v685 = vpop.f32.mrb[0].mxu0
        %v686 = vadd.f32 %v571, %v685
        %v687 = vpop.f32.mrb[0].mxu0
        %v688 = vpop.f32.mrb[0].mxu0
        %v689 = vadd.f32 %v571, %v688
        %v690 = vpop.f32.mrb[0].mxu0
        %691 = vmatprep.mubr.bf16.mxu0 %v649
        %692 = vmatmul.mubr.bf16.gmra.mrb[0].mxu0 %v540
        %v693 = vpop.f32.mrb[0].mxu0
        %v694 = vadd.f32 %v571, %v693
        %v695 = vpop.f32.mrb[0].mxu0
        %v696 = vpop.f32.mrb[0].mxu0
        %v697 = vadd.f32 %v571, %v696
        %v698 = vpop.f32.mrb[0].mxu0
        %699 = vdwg.mxu0
        %v700 = vmul.f32 %v686, 0.1
        %v701 = vmul.f32 %v689, 0.1
        %v702 = vmul.f32 %v694, 0.1
        %v703 = vmul.f32 %v697, 0.1
        %v704 = vmax.f32 %v686, %v700
        %v705 = vmax.f32 %v689, %v701
        %v706 = vmax.f32 %v694, %v702
        %v707 = vmax.f32 %v697, %v703
        %v708 = vadd.f32 %v246, %v704
        %v709 = vadd.f32 %v247, %v705
        %v710 = vadd.f32 %v248, %v706
        %v711 = vadd.f32 %v249, %v707
        %v712 = vpack.c.bf16 %v709, %v708
        %v713 = vpack.c.bf16 %v711, %v710
        %s714 = scalar_lea.vmem %s1, 64
        %v715 = vld [vmem:[%s714] sm:$0xf]
        %v716 = vld [vmem:[%s714 + $0x4] sm:$0xf]
        %v717 = vld [vmem:[%s714 + $0x8] sm:$0xf]
        %v718 = vld [vmem:[%s714 + $0xc] sm:$0xf]
        %v719 = vld [vmem:[%s714 + $0x10] sm:$0xf]
        %v720 = vld [vmem:[%s714 + $0x14] sm:$0xf]
        %v721 = vld [vmem:[%s714 + $0x18] sm:$0xf]
        %v722 = vld [vmem:[%s714 + $0x1c] sm:$0xf]
        %v723 = vld [vmem:[%s714 + $0x20] sm:$0xf]
        %v724 = vld [vmem:[%s714 + $0x24] sm:$0xf]
        %v725 = vld [vmem:[%s714 + $0x28] sm:$0xf]
        %v726 = vld [vmem:[%s714 + $0x2c] sm:$0xf]
        %v727 = vld [vmem:[%s714 + $0x30] sm:$0xf]
        %v728 = vld [vmem:[%s714 + $0x34] sm:$0xf]
        %v729 = vld [vmem:[%s714 + $0x38] sm:$0xf]
        %v730 = vld [vmem:[%s714 + $0x3c] sm:$0xf]
        %s731 = scalar_lea.vmem %s2, 1
        %v732 = vld [vmem:[%s731] sm:$0x1]
        %v734 = vlaneseq
        %v735 = vshrl.u32 %v734, 7
        %v736 = vsub.s32 0, %v735
        %v737 = vrot.slane %v732, %v736
        %v755 = vunpack.c.l.b16 %v715
        %v756 = vunpack.c.l.b16 %v716
        %v757 = vunpack.c.l.b16 %v717
        %v758 = vunpack.c.l.b16 %v718
        %v759 = vunpack.c.l.b16 %v719
        %v760 = vunpack.c.l.b16 %v720
        %v761 = vunpack.c.l.b16 %v721
        %v762 = vunpack.c.l.b16 %v722
        %v763 = vunpack.c.l.b16 %v723
        %v764 = vunpack.c.l.b16 %v724
        %v765 = vunpack.c.l.b16 %v725
        %v766 = vunpack.c.l.b16 %v726
        %v767 = vunpack.c.l.b16 %v727
        %v768 = vunpack.c.l.b16 %v728
        %v769 = vunpack.c.l.b16 %v729
        %v770 = vunpack.c.l.b16 %v730
        %v771 = vpack.c.b16 %v756, %v755
        %v772 = vpack.c.b16 %v758, %v757
        %v773 = vpack.c.b16 %v760, %v759
        %v774 = vpack.c.b16 %v762, %v761
        %v775 = vpack.c.b16 %v764, %v763
        %v776 = vpack.c.b16 %v766, %v765
        %v777 = vpack.c.b16 %v768, %v767
        %v778 = vpack.c.b16 %v770, %v769
        %787 = vmatprep.subr.bf16.mxu0 0
        %788 = vmatpush1.bf16.msra.mxu0 %v771
        %789 = vmatprep.subr.bf16.mxu0 0
        %790 = vmatpush1.bf16.msra.mxu0 %v772
        %791 = vmatprep.subr.bf16.mxu0 0
        %792 = vmatpush1.bf16.msra.mxu0 %v773
        %793 = vmatprep.subr.bf16.mxu0 0
        %794 = vmatpush1.bf16.msra.mxu0 %v774
        %795 = vmatprep.subr.bf16.mxu0 0
        %796 = vmatpush1.bf16.msra.mxu0 %v775
        %797 = vmatprep.subr.bf16.mxu0 0
        %798 = vmatpush1.bf16.msra.mxu0 %v776
        %799 = vmatprep.subr.bf16.mxu0 0
        %800 = vmatpush1.bf16.msra.mxu0 %v777
        %801 = vmatprep.subr.bf16.mxu0 0
        %802 = vmatpush1.bf16.msra.mxu0 %v778
        %803 = vmatprep.subr.bf16.mxu0 0
        %804 = vmatpush1.bf16.msra.mxu0 0
        %805 = vmatprep.subr.bf16.mxu0 0
        %806 = vmatpush1.bf16.msra.mxu0 0
        %807 = vmatprep.subr.bf16.mxu0 0
        %808 = vmatpush1.bf16.msra.mxu0 0
        %809 = vmatprep.subr.bf16.mxu0 0
        %810 = vmatpush1.bf16.msra.mxu0 0
        %811 = vmatprep.subr.bf16.mxu0 0
        %812 = vmatpush1.bf16.msra.mxu0 0
        %813 = vmatprep.subr.bf16.mxu0 0
        %814 = vmatpush1.bf16.msra.mxu0 0
        %815 = vmatprep.subr.bf16.mxu0 0
        %816 = vmatpush1.bf16.msra.mxu0 0
        %817 = vmatprep.subr.bf16.mxu0 0
        %818 = vmatpush1.bf16.msra.mxu0 0
        %819 = vmatprep.mubr.bf16.mxu0 0
        %820 = vmatmul.mubr.bf16.gmra.mrb[0].mxu0 %v712
        %v821 = vpop.f32.mrb[0].mxu0
        %v822 = vadd.f32 %v737, %v821
        %v823 = vpop.f32.mrb[0].mxu0
        %v824 = vpop.f32.mrb[0].mxu0
        %v825 = vadd.f32 %v737, %v824
        %v826 = vpop.f32.mrb[0].mxu0
        %827 = vmatprep.mubr.bf16.mxu0 0
        %828 = vmatmul.mubr.bf16.gmra.mrb[0].mxu0 %v713
        %v829 = vpop.f32.mrb[0].mxu0
        %v830 = vadd.f32 %v737, %v829
        %v831 = vpop.f32.mrb[0].mxu0
        %v832 = vpop.f32.mrb[0].mxu0
        %v833 = vadd.f32 %v737, %v832
        %v834 = vpop.f32.mrb[0].mxu0
        %835 = vdwg.mxu0
        %v836 = vmul.f32 %v822, 0.1
        %v837 = vmul.f32 %v825, 0.1
        %v838 = vmul.f32 %v830, 0.1
        %v839 = vmul.f32 %v833, 0.1
        %v840 = vmax.f32 %v822, %v836
        %v841 = vmax.f32 %v825, %v837
        %v842 = vmax.f32 %v830, %v838
        %v843 = vmax.f32 %v833, %v839
        %v845 = vrot.slane %v843, 7
        %v850 = vrot.slane %v840, 7
        %v851 = vrot.slane %v841, 7
        %v852 = vsel %vm487, %v850, %v851
        %v853 = vrot.slane %v842, 7
        %v854 = vsel %vm487, %v851, %v853
        %v855 = vsel %vm487, %v853, %v845
        %v860 = vsel %vm487, %v845, %v850
        %v861 = vmul.f32 %v860, %v323
        %v862 = vmul.f32 %v852, %v324
        %v863 = vmul.f32 %v854, %v325
        %v864 = vmul.f32 %v855, %v326
        %v865 = vrot.slane %v840, 1
        %v866 = vrot.slane %v841, 1
        %v867 = vsel %vm503, %v865, %v866
        %v868 = vrot.slane %v842, 1
        %v869 = vsel %vm503, %v866, %v868
        %v870 = vrot.slane %v843, 1
        %v871 = vsel %vm503, %v868, %v870
        %v877 = vsel %vm503, %v870, %v865
        %v878 = vmul.f32 %v867, %v347
        %v879 = vmul.f32 %v869, %v348
        %v880 = vmul.f32 %v871, %v349
        %v881 = vmul.f32 %v877, %v350
        %882 = vrot.lane.b32.xlu0 %v840, 64
        %v883 = vpop.permute.xlu0 %882
        %884 = vrot.lane.b32.xlu0 %v841, 64
        %v885 = vpop.permute.xlu0 %884
        %886 = vrot.lane.b32.xlu0 %v842, 64
        %v887 = vpop.permute.xlu0 %886
        %888 = vrot.lane.b32.xlu0 %v843, 64
        %v889 = vpop.permute.xlu0 %888
        %v894 = vsel %vm533, %v861, %v883
        %v895 = vsel %vm533, %v862, %v885
        %v896 = vsel %vm533, %v863, %v887
        %v897 = vsel %vm533, %v864, %v889
        %v898 = vpack.c.bf16 %v895, %v894
        %v899 = vpack.c.bf16 %v879, %v878
        %v900 = vpack.c.bf16 %v897, %v896
        %v901 = vpack.c.bf16 %v881, %v880
        %s902 = scalar_lea.vmem %s3, 96
        %v903 = vld [vmem:[%s902] sm:$0xf]
        %v904 = vld [vmem:[%s902 + $0x4] sm:$0xf]
        %v905 = vld [vmem:[%s902 + $0x8] sm:$0xf]
        %v906 = vld [vmem:[%s902 + $0xc] sm:$0xf]
        %v907 = vld [vmem:[%s902 + $0x10] sm:$0xf]
        %v908 = vld [vmem:[%s902 + $0x14] sm:$0xf]
        %v909 = vld [vmem:[%s902 + $0x18] sm:$0xf]
        %v910 = vld [vmem:[%s902 + $0x1c] sm:$0xf]
        %v911 = vld [vmem:[%s902 + $0x20] sm:$0xf]
        %v912 = vld [vmem:[%s902 + $0x24] sm:$0xf]
        %v913 = vld [vmem:[%s902 + $0x28] sm:$0xf]
        %v914 = vld [vmem:[%s902 + $0x2c] sm:$0xf]
        %v915 = vld [vmem:[%s902 + $0x30] sm:$0xf]
        %v916 = vld [vmem:[%s902 + $0x34] sm:$0xf]
        %v917 = vld [vmem:[%s902 + $0x38] sm:$0xf]
        %v918 = vld [vmem:[%s902 + $0x3c] sm:$0xf]
        %v919 = vld [vmem:[%s902 + $0x40] sm:$0xf]
        %v920 = vld [vmem:[%s902 + $0x44] sm:$0xf]
        %v921 = vld [vmem:[%s902 + $0x48] sm:$0xf]
        %v922 = vld [vmem:[%s902 + $0x4c] sm:$0xf]
        %v923 = vld [vmem:[%s902 + $0x50] sm:$0xf]
        %v924 = vld [vmem:[%s902 + $0x54] sm:$0xf]
        %v925 = vld [vmem:[%s902 + $0x58] sm:$0xf]
        %v926 = vld [vmem:[%s902 + $0x5c] sm:$0xf]
        %s927 = scalar_lea.vmem %s4, 1
        %v928 = vld [vmem:[%s927] sm:$0x1]
        %v930 = vlaneseq
        %v931 = vshrl.u32 %v930, 7
        %v932 = vsub.s32 0, %v931
        %v933 = vrot.slane %v928, %v932
        %v959 = vunpack.c.l.b16 %v903
        %v960 = vunpack.c.l.b16 %v904
        %v961 = vunpack.c.l.b16 %v905
        %v962 = vunpack.c.l.b16 %v906
        %v963 = vunpack.c.l.b16 %v907
        %v964 = vunpack.c.l.b16 %v908
        %v965 = vunpack.c.l.b16 %v909
        %v966 = vunpack.c.l.b16 %v910
        %v967 = vunpack.c.l.b16 %v911
        %v968 = vunpack.c.l.b16 %v912
        %v969 = vunpack.c.l.b16 %v913
        %v970 = vunpack.c.l.b16 %v914
        %v971 = vunpack.c.l.b16 %v915
        %v972 = vunpack.c.l.b16 %v916
        %v973 = vunpack.c.l.b16 %v917
        %v974 = vunpack.c.l.b16 %v918
        %v975 = vunpack.c.l.b16 %v919
        %v976 = vunpack.c.l.b16 %v920
        %v977 = vunpack.c.l.b16 %v921
        %v978 = vunpack.c.l.b16 %v922
        %v979 = vunpack.c.l.b16 %v923
        %v980 = vunpack.c.l.b16 %v924
        %v981 = vunpack.c.l.b16 %v925
        %v982 = vunpack.c.l.b16 %v926
        %v983 = vpack.c.b16 %v960, %v959
        %v984 = vpack.c.b16 %v962, %v961
        %v985 = vpack.c.b16 %v964, %v963
        %v986 = vpack.c.b16 %v966, %v965
        %v987 = vpack.c.b16 %v968, %v967
        %v988 = vpack.c.b16 %v970, %v969
        %v989 = vpack.c.b16 %v972, %v971
        %v990 = vpack.c.b16 %v974, %v973
        %v991 = vpack.c.b16 %v976, %v975
        %v992 = vpack.c.b16 %v978, %v977
        %v993 = vpack.c.b16 %v980, %v979
        %v994 = vpack.c.b16 %v982, %v981
        %v1008 = vsel %vm533, %v899, 0
        %v1011 = vsel %vm533, %v901, 0
        %1013 = vmatprep.subr.bf16.mxu0 0
        %1014 = vmatpush1.bf16.msra.mxu0 %v983
        %1015 = vmatprep.subr.bf16.mxu0 0
        %1016 = vmatpush1.bf16.msra.mxu0 %v984
        %1017 = vmatprep.subr.bf16.mxu0 0
        %1018 = vmatpush1.bf16.msra.mxu0 %v985
        %1019 = vmatprep.subr.bf16.mxu0 0
        %1020 = vmatpush1.bf16.msra.mxu0 %v986
        %1021 = vmatprep.subr.bf16.mxu0 0
        %1022 = vmatpush1.bf16.msra.mxu0 %v987
        %1023 = vmatprep.subr.bf16.mxu0 0
        %1024 = vmatpush1.bf16.msra.mxu0 %v988
        %1025 = vmatprep.subr.bf16.mxu0 0
        %1026 = vmatpush1.bf16.msra.mxu0 %v989
        %1027 = vmatprep.subr.bf16.mxu0 0
        %1028 = vmatpush1.bf16.msra.mxu0 %v990
        %1029 = vmatprep.subr.bf16.mxu0 0
        %1030 = vmatpush1.bf16.msra.mxu0 %v991
        %1031 = vmatprep.subr.bf16.mxu0 0
        %1032 = vmatpush1.bf16.msra.mxu0 %v992
        %1033 = vmatprep.subr.bf16.mxu0 0
        %1034 = vmatpush1.bf16.msra.mxu0 %v993
        %1035 = vmatprep.subr.bf16.mxu0 0
        %1036 = vmatpush1.bf16.msra.mxu0 %v994
        %1037 = vmatprep.subr.bf16.mxu0 0
        %1038 = vmatpush1.bf16.msra.mxu0 0
        %1039 = vmatprep.subr.bf16.mxu0 0
        %1040 = vmatpush1.bf16.msra.mxu0 0
        %1041 = vmatprep.subr.bf16.mxu0 0
        %1042 = vmatpush1.bf16.msra.mxu0 0
        %1043 = vmatprep.subr.bf16.mxu0 0
        %1044 = vmatpush1.bf16.msra.mxu0 0
        %1045 = vmatprep.mubr.bf16.mxu0 %v1008
        %1046 = vmatmul.mubr.bf16.gmra.mrb[0].mxu0 %v898
        %v1047 = vpop.f32.mrb[0].mxu0
        %v1048 = vadd.f32 %v933, %v1047
        %v1049 = vpop.f32.mrb[0].mxu0
        %v1050 = vpop.f32.mrb[0].mxu0
        %v1051 = vadd.f32 %v933, %v1050
        %v1052 = vpop.f32.mrb[0].mxu0
        %1053 = vmatprep.mubr.bf16.mxu0 %v1011
        %1054 = vmatmul.mubr.bf16.gmra.mrb[0].mxu0 %v900
        %v1055 = vpop.f32.mrb[0].mxu0
        %v1056 = vadd.f32 %v933, %v1055
        %v1057 = vpop.f32.mrb[0].mxu0
        %v1058 = vpop.f32.mrb[0].mxu0
        %v1059 = vadd.f32 %v933, %v1058
        %v1060 = vpop.f32.mrb[0].mxu0
        %1061 = vdwg.mxu0
        %v1062 = vmul.f32 %v1048, 0.1
        %v1063 = vmul.f32 %v1051, 0.1
        %v1064 = vmul.f32 %v1056, 0.1
        %v1065 = vmul.f32 %v1059, 0.1
        %v1066 = vmax.f32 %v1048, %v1062
        %v1067 = vmax.f32 %v1051, %v1063
        %v1068 = vmax.f32 %v1056, %v1064
        %v1069 = vmax.f32 %v1059, %v1065
        %v1070 = vadd.f32 %v708, %v1066
        %v1071 = vadd.f32 %v709, %v1067
        %v1072 = vadd.f32 %v710, %v1068
        %v1073 = vadd.f32 %v711, %v1069
        %1074 = vst [vmem:[%s242] sm:$0xff] %v1070
        %1075 = vst [vmem:[%s242 + $0x8] sm:$0xff] %v1071
        %1076 = vst [vmem:[%s242 + $0x10] sm:$0xff] %v1072
        %1077 = vst [vmem:[%s242 + $0x18] sm:$0xff] %v1073
        %s1078 = sand.u32 %s140, 1
        %s1079 = scalar_lea.sflag [#allocation4], %s1078
        %s1080 = sand.u32 %s140, 1
        %s1081 = smul.addr %s1080, 32
        %s1082 = scalar_lea.vmem [#allocation5], %s1081
        // Predicated region
        $region45: #{tpu_custom_call.1} parent=39 // pred_check
          %p1083 = pneg %p150
        $region46: #{tpu_custom_call.1} parent=39 // pred_check_branch
          %1085 = sbr.rel (%p1083) target = $region48
        $region47: #{tpu_custom_call.1} parent=39 // pred_region
          %s1086 = smul.u32 4, %s22
          %s1088 = ssub.s32 512, 512
          %1089 = vsyncadd %s1079, %s1088
          %s1090 = smul.addr %s1086, 128
          %s1091 = scalar_lea.hbm %s5, %s1090
          %s1092 = sshll.u32 %s1082, 4
          %s1093 = int_to_ptr.vmem [resolvable:$true] %s1092
          %1098 = dma.vmem_to_hbm [thread:$0]  %s1093, 512, %s1091, %s1079, 128, 128, 8
        $region48: #{tpu_custom_call.1} parent=39 // pred_fallthru
          _
      $region40: #{tpu_custom_call.1} parent=5 // pred_fallthru
        _
      %p1099 = scmp.le.s32.totalorder 2, %s17
      // Predicated region
      $region49: #{tpu_custom_call.1} parent=5 // pred_check
        %p1100 = pneg %p1099
      $region50: #{tpu_custom_call.1} parent=5 // pred_check_branch
        %1102 = sbr.rel (%p1100) target = $region52
      $region51: #{tpu_custom_call.1} parent=5 // pred_region
        %s1103 = ssub.s32 %s17, 2
        // Predicated region
        $region53: #{tpu_custom_call.1} parent=51 // pred_check
          %p1104 = pneg %p156
        $region54: #{tpu_custom_call.1} parent=51 // pred_check_branch
          %1106 = sbr.rel (%p1104) target = $region56
        $region55: #{tpu_custom_call.1} parent=51 // pred_region
          %s1107 = sand.u32 %s141, 1
          %s1108 = scalar_lea.sflag [#allocation4], %s1107
          %s1109 = sand.u32 %s141, 1
          %s1110 = smul.addr %s1109, 32
          %s1111 = scalar_lea.vmem [#allocation5], %s1110
          %1112 = dma.done %s1108, 512
        $region56: #{tpu_custom_call.1} parent=51 // pred_fallthru
          _
      $region52: #{tpu_custom_call.1} parent=5 // pred_fallthru
        _
    $region6: #{tpu_custom_call.1} parent=1 // loop_footer
      %s21 = sadd.s32 1, %s17
    $region7: #{tpu_custom_call.1} parent=1 // loop_footer_branch
      %16 = sbr.rel target = $region3
    $region8: #{tpu_custom_call.1} parent=1 // loop_exit
      _
    %1113 = vsyncpa [#allocation3], 1
    %s1114 = scalar_lea.sflag [#allocation3], 1
    %1115 = vsyncpa %s1114, 1
    %1116 = vsyncpa [#allocation4], 1
    %s1117 = scalar_lea.sflag [#allocation4], 1
    %1118 = vsyncpa %s1117, 1

</llo_original>
